<compile_context>
chip_gen: v5e
topology: v5e:2x2
jax: 0.10.0
libtpu: 0.0.40
codegen_flags: <defaults>
</compile_context>

<pallas_src>
import functools
import math

import jax
import jax.numpy as jnp
from jax.experimental import pallas as pl
from jax.experimental.pallas import tpu as pltpu


def _round_up(v: int, m: int) -> int:
    return (v + m - 1) // m * m


def _vmem_capacity_bytes() -> int:
    try:
        cap = int(pltpu.get_tpu_info().vmem_capacity_bytes)
        if cap > 0:
            return cap
    except Exception:
        pass
    # Conservative default (v7x-class) if the query is unavailable.
    return 64 * 1024 * 1024


def _pick_tile(total: int, base: int) -> int:
    """Largest tile <= base that is a multiple of 128 and divides `total`.

    `total` is always a multiple of 128, so this terminates at 128.
    """
    if total <= base:
        return total
    t = (base // 128) * 128
    while t > 128 and total % t != 0:
        t -= 128
    return t


# --------------------------------------------------------------------------
# Kernels
# --------------------------------------------------------------------------

def _resident_kernel(*refs, has_bias):
    """Weight-resident schedule: whole (K, Npad) W block, M-only grid."""
    if has_bias:
        x_ref, w_ref, b_ref, o_ref = refs
    else:
        x_ref, w_ref, o_ref = refs
        b_ref = None
    acc = jnp.dot(x_ref[...], w_ref[...], preferred_element_type=jnp.float32)
    if has_bias:
        acc = acc + b_ref[...].astype(jnp.float32)
    o_ref[...] = acc.astype(o_ref.dtype)


def _tiled_kernel(*refs, has_bias):
    """(i, j, k) tiled schedule with an f32 VMEM accumulator."""
    if has_bias:
        x_ref, w_ref, b_ref, o_ref, acc_ref = refs
    else:
        x_ref, w_ref, o_ref, acc_ref = refs
        b_ref = None
    k = pl.program_id(2)

    @pl.when(k == 0)
    def _():
        acc_ref[...] = jnp.zeros_like(acc_ref)

    acc_ref[...] += jnp.dot(
        x_ref[...], w_ref[...], preferred_element_type=jnp.float32
    )

    @pl.when(k == pl.num_programs(2) - 1)
    def _():
        acc = acc_ref[...]
        if has_bias:
            acc = acc + b_ref[...].astype(jnp.float32)
        o_ref[...] = acc.astype(o_ref.dtype)


# --------------------------------------------------------------------------
# Wrapper (per-call path touches only x; W/bias are prepared at init)
# --------------------------------------------------------------------------

def _linear_apply(x, w, b, *, has_bias, resident, n_out, kp, np_, tk, tn,
                  base_tm, pack, two_core_hint, vmem_cap, compute_dtype):
    lead_shape = x.shape[:-1]
    k_in = x.shape[-1]
    m = int(math.prod(lead_shape)) if lead_shape else 1

    out_dtype = x.dtype
    itemsize = jnp.dtype(compute_dtype).itemsize
    out_itemsize = jnp.dtype(out_dtype).itemsize

    x2d = x.reshape(m, k_in).astype(compute_dtype)
    if (not resident) and kp != k_in:
        # K padding (zeros) is required for correctness under K tiling;
        # garbage K columns would feed real output elements.
        x2d = jnp.pad(x2d, ((0, 0), (0, kp - k_in)))

    # Sublane-aligned M tile, clamped to the problem size (no M padding; the
    # ragged edge block is handled by masked writes).
    tm = min(base_tm, _round_up(max(m, 1), pack))
    grid_m = pl.cdiv(m, tm)

    vmem_ceiling = max(int(vmem_cap * 0.8), 32 * 1024 * 1024)

    if resident:
        # W (and bias) live in VMEM for the whole grid; only x / y stream.
        if two_core_hint:
            while grid_m < 2 and tm > pack:
                tm = max(pack, _round_up(tm // 2, pack))
                grid_m = pl.cdiv(m, tm)
        grid = (grid_m,)
        in_specs = [
            pl.BlockSpec((tm, kp), lambda i: (i, 0)),
            pl.BlockSpec((kp, np_), lambda i: (0, 0)),
        ]
        inputs = [x2d, w]
        if has_bias:
            in_specs.append(pl.BlockSpec((1, np_), lambda i: (0, 0)))
            inputs.append(b)
        out_spec = pl.BlockSpec((tm, np_), lambda i: (i, 0))
        scratch = []
        kernel = functools.partial(_resident_kernel, has_bias=has_bias)
        dims = ("parallel",)

        vmem_est = (
            (2 * kp * np_ + 2 * tm * kp + (2 * np_ if has_bias else 0))
            * itemsize
            + 2 * tm * np_ * out_itemsize
        )
        flops = 2 * m * kp * np_
        bytes_accessed = (
            (m * kp + kp * np_ + (np_ if has_bias else 0)) * itemsize
            + m * np_ * out_itemsize
        )
    else:
        grid_n = np_ // tn
        grid_k = kp // tk
        if two_core_hint:
            while grid_m * grid_n < 2 and tm > pack:
                tm = max(pack, _round_up(tm // 2, pack))
                grid_m = pl.cdiv(m, tm)
        grid = (grid_m, grid_n, grid_k)
        in_specs = [
            pl.BlockSpec((tm, tk), lambda i, j, k: (i, k)),
            pl.BlockSpec((tk, tn), lambda i, j, k: (k, j)),
        ]
        inputs = [x2d, w]
        if has_bias:
            in_specs.append(pl.BlockSpec((1, tn), lambda i, j, k: (0, j)))
            inputs.append(b)
        out_spec = pl.BlockSpec((tm, tn), lambda i, j, k: (i, j))
        scratch = [pltpu.VMEM((tm, tn), jnp.float32)]
        kernel = functools.partial(_tiled_kernel, has_bias=has_bias)
        dims = ("parallel", "parallel", "arbitrary")

        vmem_est = (
            2 * (tm * tk + tk * tn + (tn if has_bias else 0)) * itemsize
            + 2 * tm * tn * out_itemsize
            + tm * tn * 4
        )
        flops = 2 * m * kp * np_
        # X is re-read once per N tile, W once per M tile under this schedule.
        bytes_accessed = (
            (grid_n * m * kp + grid_m * kp * np_
             + (grid_m * grid_n * np_ if has_bias else 0)) * itemsize
            + m * np_ * out_itemsize
        )

    vmem_limit = min(
        max(int(vmem_est * 1.3) + (2 << 20), 32 * 1024 * 1024),
        vmem_ceiling,
    )

    y2d = pl.pallas_call(
        kernel,
        out_shape=jax.ShapeDtypeStruct((m, np_), out_dtype),
        grid_spec=pltpu.PrefetchScalarGridSpec(
            num_scalar_prefetch=0,
            grid=grid,
            in_specs=in_specs,
            out_specs=out_spec,
            scratch_shapes=scratch,
        ),
        compiler_params=pltpu.CompilerParams(
            dimension_semantics=dims,
            vmem_limit_bytes=vmem_limit,
        ),
        cost_estimate=pl.CostEstimate(
            flops=int(flops),
            transcendentals=0,
            bytes_accessed=int(bytes_accessed),
        ),
    )(*inputs)

    if np_ != n_out:
        y2d = y2d[:, :n_out]
    return y2d.reshape(*lead_shape, n_out)


# --------------------------------------------------------------------------
# Module mirror
# --------------------------------------------------------------------------

class LinearPallas:
    """Mirror of the PyTorch `Linear` wrapper module (dict in / dict out)."""

    def __init__(self, in_features, out_features, bias=True,
                 input_name="context", output_name="prediction", *,
                 key, use_bf16=False):
        self.input_name = input_name
        self.output_name = output_name

        k_w, k_b = jax.random.split(key)
        bound = 1.0 / math.sqrt(in_features)
        # PyTorch stores weight as (out, in); we keep the transpose (in, out).
        w = jax.random.uniform(
            k_w, (out_features, in_features), jnp.float32, -bound, bound
        ).T
        b = (
            jax.random.uniform(k_b, (out_features,), jnp.float32, -bound, bound)
            if bias else None
        )
        # Unpadded parameters, PyTorch-equivalent layout (for reference math).
        self.weight_t = jnp.asarray(w)          # (in_features, out_features)
        self.bias = b

        compute_dtype = jnp.bfloat16 if use_bf16 else jnp.float32
        itemsize = jnp.dtype(compute_dtype).itemsize
        pack = max(8, 32 // itemsize)           # 8 f32 / 16 bf16 / 32 int8

        vmem_cap = _vmem_capacity_bytes()
        two_core_hint = vmem_cap <= 64 * 1024 * 1024   # v7x-class: 2 TCs/chip

        if vmem_cap <= 64 * 1024 * 1024:        # v7x: 64 MiB VMEM / TC
            base_tm, base_tn, base_tk = 256, 512, 1024
        else:                                    # v5e / v6e: 128 MiB VMEM
            base_tm, base_tn, base_tk = 512, 512, 2048

        np_ = _round_up(out_features, 128)

        # Weight-resident fast path: whole (K, Npad) W block stays in VMEM.
        # Conservative budget assumes the pipeline double-buffers everything.
        est_resident = (
            (2 * in_features * np_ + 2 * base_tm * in_features) * itemsize
            + 2 * base_tm * np_ * 4
            + 2 * np_ * itemsize
        )
        resident = est_resident <= int(vmem_cap * 0.55)

        w_prep = self.weight_t.astype(compute_dtype)
        if resident:
            kp = in_features                    # whole-K block == full dim
            tk = in_features
            tn = np_
            if np_ != out_features:
                w_prep = jnp.pad(w_prep, ((0, 0), (0, np_ - out_features)))
        else:
            kp = _round_up(in_features, 128)
            tk = _pick_tile(kp, base_tk)
            tn = _pick_tile(np_, base_tn)
            w_prep = jnp.pad(
                w_prep,
                ((0, kp - in_features), (0, np_ - out_features)),
            )
        self._w = jnp.asarray(w_prep)           # one-time prepared weight

        if bias:
            b_prep = b.astype(compute_dtype).reshape(1, out_features)
            if np_ != out_features:
                b_prep = jnp.pad(b_prep, ((0, 0), (0, np_ - out_features)))
            self._b = jnp.asarray(b_prep)
        else:
            self._b = None

        self._apply = jax.jit(functools.partial(
            _linear_apply,
            has_bias=bias,
            resident=resident,
            n_out=out_features,
            kp=kp, np_=np_, tk=tk, tn=tn,
            base_tm=base_tm, pack=pack,
            two_core_hint=two_core_hint,
            vmem_cap=vmem_cap,
            compute_dtype=compute_dtype,
        ))

    def __call__(self, batch: dict) -> dict:
        x = batch[self.input_name]
        batch[self.output_name] = self._apply(x, self._w, self._b)
        return batch


if __name__ == "__main__":
    key = jax.random.PRNGKey(0)
    k_init, k_x, k_init2, k_x2, k_init3 = jax.random.split(key, 5)

    # Case 1: module-style shapes (batch=2, seq=8, in=32, out=64) with bias.
    batch_size, seq, in_features, out_features = 2, 8, 32, 64
    module = LinearPallas(in_features, out_features, bias=True, key=k_init)
    x = jax.random.normal(k_x, (batch_size, seq, in_features), jnp.float32)
    out_batch = module({"context": x})
    y = jax.block_until_ready(out_batch["prediction"])
    y_ref = x @ module.weight_t + module.bias
    assert y.shape == (batch_size, seq, out_features)
    assert jnp.allclose(y, y_ref, atol=1e-5, rtol=1e-5)

    # Case 2: odd (non-tile-divisible) shapes, no bias — ragged M / padded N.
    module2 = LinearPallas(48, 96, bias=False, key=k_init2)
    x2 = jax.random.normal(k_x2, (3, 100, 48), jnp.float32)
    y2 = jax.block_until_ready(module2({"context": x2})["prediction"])
    y2_ref = x2 @ module2.weight_t
    assert y2.shape == (3, 100, 96)
    assert jnp.allclose(y2, y2_ref, atol=1e-5, rtol=1e-5)

    # Case 3: optional bf16 MXU input path (f32 accumulation), loose tolerance.
    module3 = LinearPallas(in_features, out_features, bias=True, key=k_init3,
                           use_bf16=True)
    y3 = jax.block_until_ready(module3({"context": x})["prediction"])
    y3_ref = x @ module3.weight_t + module3.bias
    assert y3.shape == (batch_size, seq, out_features)
    assert jnp.allclose(y3, y3_ref, atol=1e-1, rtol=1e-1)

    print("KERNEL_OK")
</pallas_src>

<mosaic_0001>
module attributes {stable_mosaic.version = 11 : i64} {
  func.func @_resident_kernel(%arg0: i32, %arg1: memref<8x32xf32, #tpu.memory_space<vmem>>, %arg2: memref<32x128xf32, #tpu.memory_space<vmem>>, %arg3: memref<1x128xf32, #tpu.memory_space<vmem>>, %arg4: memref<8x128xf32, #tpu.memory_space<vmem>>) attributes {dimension_semantics = [#tpu.dimension_semantics<parallel>], iteration_bounds = array<i64: 2>, scalar_prefetch = 0 : i64, scratch_operands = 0 : i64, tpu.core_type = #tpu.core_type<tc>, window_params = [{transform_indices = @transform_0, window_bounds = array<i64: 8, 32>}, {pipeline_mode = #tpu.pipeline_mode<synchronous>, transform_indices = @transform_1, window_bounds = array<i64: 32, 128>}, {pipeline_mode = #tpu.pipeline_mode<synchronous>, transform_indices = @transform_2, window_bounds = array<i64: 1, 128>}, {transform_indices = @transform_3, window_bounds = array<i64: 8, 128>}]} {
    %c0 = arith.constant 0 : index
    %c0_0 = arith.constant 0 : index
    %0 = vector.load %arg1[%c0, %c0_0] : memref<8x32xf32, #tpu.memory_space<vmem>>, vector<8x32xf32>
    %c0_1 = arith.constant 0 : index
    %c0_2 = arith.constant 0 : index
    %1 = vector.load %arg2[%c0_1, %c0_2] : memref<32x128xf32, #tpu.memory_space<vmem>>, vector<32x128xf32>
    %cst = arith.constant dense<0.000000e+00> : vector<8x128xf32>
    %2 = tpu.matmul %0, %1, %cst {dimension_numbers = #tpu.dot_dimension_numbers<[1], [0], [0], [1], [0, 0, 1, 1], [], []>} : vector<8x32xf32>, vector<32x128xf32>, vector<8x128xf32> -> vector<8x128xf32>
    %c0_3 = arith.constant 0 : index
    %c0_4 = arith.constant 0 : index
    %3 = vector.load %arg3[%c0_3, %c0_4] : memref<1x128xf32, #tpu.memory_space<vmem>>, vector<1x128xf32>
    %4 = vector.broadcast %3 : vector<1x128xf32> to vector<8x128xf32>
    %5 = arith.addf %2, %4 : vector<8x128xf32>
    %c0_5 = arith.constant 0 : index
    %c0_6 = arith.constant 0 : index
    %6 = vector.load %arg4[%c0_5, %c0_6] : memref<8x128xf32, #tpu.memory_space<vmem>>, vector<8x128xf32>
    tpu.vector_store %arg4[%c0_5, %c0_6], %5 {strides = array<i32>} : memref<8x128xf32, #tpu.memory_space<vmem>>, vector<8x128xf32>,
    return
  }
  func.func @transform_0(%arg0: i32) -> (i32, i32) {
    %c0_i32 = arith.constant 0 : i32
    %c0_i32_0 = arith.constant 0 : i32
    return %arg0, %c0_i32 : i32, i32
  }
  func.func @transform_1(%arg0: i32) -> (i32, i32) {
    %c0_i32 = arith.constant 0 : i32
    %c0_i32_0 = arith.constant 0 : i32
    %c0_i32_1 = arith.constant 0 : i32
    return %c0_i32, %c0_i32_0 : i32, i32
  }
  func.func @transform_2(%arg0: i32) -> (i32, i32) {
    %c0_i32 = arith.constant 0 : i32
    %c0_i32_0 = arith.constant 0 : i32
    %c0_i32_1 = arith.constant 0 : i32
    return %c0_i32, %c0_i32_0 : i32, i32
  }
  func.func @transform_3(%arg0: i32) -> (i32, i32) {
    %c0_i32 = arith.constant 0 : i32
    %c0_i32_0 = arith.constant 0 : i32
    return %arg0, %c0_i32 : i32, i32
  }
}

</mosaic_0001>

<llo_original>
// kernel: _linear_apply.1
$region0: #{_linear_apply.1}
  #allocation0 [shape = 'u32[]', space=smem, size = 0x4, offset = 0x4, fixed_abs, tag = 'smem constant byte address 0x4 - core index']
  #allocation1 [shape = 'u32[72,128]{1,0:T(1,128)}', space=vmem, size = 0x9000, scoped, tag = 'internal scratch']
  %s0 = inlined_call_operand.hbm [shape: f32[16,32], index: 0, kind: input, shape index: {}]
  %s1 = inlined_call_operand.hbm [shape: f32[32,128], index: 1, kind: input, shape index: {}]
  %s2 = inlined_call_operand.vmem [shape: f32[1,128], index: 2, kind: input, shape index: {}]
  %s3 = inlined_call_operand.vmem [shape: f32[16,128], index: 3, kind: output, shape index: {}]
  %s4 = sld [smem:[#allocation0]]
  $region53: #{_linear_apply.1} parent=0
    _
  %s6 = ssub.s32 1, %s4
  %s7 = scalar_select 0, %s6, %s4
  $region1: #{_linear_apply.1} parent=0
    #allocation2 [shape = 'u8[8192]{0}', space=vmem, size = 0x2000, scoped, tag = 'input window, operand 0']
    #allocation3 [shape = 's32[2]{0}', space=sflag, size = 0x8, scoped, tag = 'scoped memory for _linear_apply.1']
    #allocation4 [shape = 'u8[16384]{0}', space=vmem, size = 0x4000, scoped, tag = 'input window, operand 1, single buffered']
    #allocation5 [shape = 's32[1]{0}', space=sflag, size = 0x4, scoped, tag = 'scoped memory for _linear_apply.1']
    %8 = vsyncpa [#allocation3], 0
    %s9 = scalar_lea.sflag [#allocation3], 1
    %10 = vsyncpa %s9, 0
    %11 = vsyncpa [#allocation5], 0
    loop: start=0, step=1, limit=4
    $region2: #{_linear_apply.1} parent=1 // loop_pre_header
      _
    $region3: #{_linear_apply.1} parent=1 // loop_header
      %s13 = sphi 0, %s17
      %p14 = scmp.ge.s32.totalorder %s13, 4
      %s23 = sphi 0, %s25
      %s26 = sphi 0, %s23
      %s27 = sphi 0, %s26
      %s43 = sphi 0, %s27
      %s47 = sphi 0, %s47
      %s49 = sphi 0, %s47
      %s50 = sphi 0, %s49
      %s64 = sphi 0, %s50
      %s68 = sphi 0, %s68
      %s70 = sphi 0, %s68
      %s71 = sphi 0, %s70
      %s85 = sphi 0, %s71
      %s91 = sphi 0, %s93
      %s94 = sphi 0, %s91
      %s95 = sphi 0, %s94
      %s111 = sphi 0, %s95
    $region4: #{_linear_apply.1} parent=1 // loop_header_branch
      %16 = sbr.rel (%p14) target = $region8
    $region5: #{_linear_apply.1} parent=1 // loop_body
      %s18 = ssub.s32 %s13, 1
      %s19 = ssub.s32 %s13, 2
      %s20 = sadd.s32 %s13, 1
      %s21 = ssub.s32 %s13, %s20
      %p22 = scmp.eq.s32.totalorder %s21, 0
      %s24 = sadd.s32 %s23, 1
      %s25 = scalar_select %p22, %s23, %s24
      %p28 = pneg %p22
      %p29 = scmp.eq.s32.totalorder %s13, 1
      %p30 = por %p28, %p29
      %p31 = scmp.ne.s32.totalorder %s23, %s26
      %p32 = scmp.eq.s32.totalorder %s13, 0
      %p33 = por %p31, %p32
      %p34 = scmp.ne.s32.totalorder %s23, %s26
      %p35 = scmp.eq.s32.totalorder %s18, 1
      %p36 = por %p34, %p35
      %p37 = scmp.ne.s32.totalorder %s26, %s27
      %p38 = scmp.eq.s32.totalorder %s18, 0
      %p39 = por %p37, %p38
      %p40 = scmp.ne.s32.totalorder %s26, %s27
      %p41 = scmp.eq.s32.totalorder %s19, 1
      %p42 = por %p40, %p41
      %p44 = scmp.ne.s32.totalorder %s27, %s43
      %p45 = scmp.eq.s32.totalorder %s19, 0
      %p46 = por %p44, %p45
      %s48 = sadd.s32 %s47, 1
      %p51 = scmp.eq.s32.totalorder %s13, 1
      %p52 = scmp.ne.s32.totalorder %s47, %s49
      %p53 = scmp.eq.s32.totalorder %s13, 0
      %p54 = por %p52, %p53
      %p55 = scmp.ne.s32.totalorder %s47, %s49
      %p56 = scmp.eq.s32.totalorder %s18, 1
      %p57 = por %p55, %p56
      %p58 = scmp.ne.s32.totalorder %s49, %s50
      %p59 = scmp.eq.s32.totalorder %s18, 0
      %p60 = por %p58, %p59
      %p61 = scmp.ne.s32.totalorder %s49, %s50
      %p62 = scmp.eq.s32.totalorder %s19, 1
      %p63 = por %p61, %p62
      %p65 = scmp.ne.s32.totalorder %s50, %s64
      %p66 = scmp.eq.s32.totalorder %s19, 0
      %p67 = por %p65, %p66
      %s69 = sadd.s32 %s68, 1
      %p72 = scmp.eq.s32.totalorder %s13, 1
      %p73 = scmp.ne.s32.totalorder %s68, %s70
      %p74 = scmp.eq.s32.totalorder %s13, 0
      %p75 = por %p73, %p74
      %p76 = scmp.ne.s32.totalorder %s68, %s70
      %p77 = scmp.eq.s32.totalorder %s18, 1
      %p78 = por %p76, %p77
      %p79 = scmp.ne.s32.totalorder %s70, %s71
      %p80 = scmp.eq.s32.totalorder %s18, 0
      %p81 = por %p79, %p80
      %p82 = scmp.ne.s32.totalorder %s70, %s71
      %p83 = scmp.eq.s32.totalorder %s19, 1
      %p84 = por %p82, %p83
      %p86 = scmp.ne.s32.totalorder %s71, %s85
      %p87 = scmp.eq.s32.totalorder %s19, 0
      %p88 = por %p86, %p87
      %s89 = ssub.s32 %s13, %s20
      %p90 = scmp.eq.s32.totalorder %s89, 0
      %s92 = sadd.s32 %s91, 1
      %s93 = scalar_select %p90, %s91, %s92
      %p96 = pneg %p90
      %p97 = scmp.eq.s32.totalorder %s13, 1
      %p98 = por %p96, %p97
      %p99 = scmp.ne.s32.totalorder %s91, %s94
      %p100 = scmp.eq.s32.totalorder %s13, 0
      %p101 = por %p99, %p100
      %p102 = scmp.ne.s32.totalorder %s91, %s94
      %p103 = scmp.eq.s32.totalorder %s18, 1
      %p104 = por %p102, %p103
      %p105 = scmp.ne.s32.totalorder %s94, %s95
      %p106 = scmp.eq.s32.totalorder %s18, 0
      %p107 = por %p105, %p106
      %p108 = scmp.ne.s32.totalorder %s94, %s95
      %p109 = scmp.eq.s32.totalorder %s19, 1
      %p110 = por %p108, %p109
      %p112 = scmp.ne.s32.totalorder %s95, %s111
      %p113 = scmp.eq.s32.totalorder %s19, 0
      %p114 = por %p112, %p113
      %p115 = scmp.le.s32.totalorder 1, %s13
      %p116 = scmp.lt.s32.totalorder %s13, 3
      %p117 = pnand %p115, %p116
      %p118 = pneg %p117
      // Predicated region
      $region9: #{_linear_apply.1} parent=5 // pred_check
        _
      $region10: #{_linear_apply.1} parent=5 // pred_check_branch
        %120 = sbr.rel (%p117) target = $region12
      $region11: #{_linear_apply.1} parent=5 // pred_region
        %s121 = ssub.s32 %s13, 1
        // Predicated region
        $region13: #{_linear_apply.1} parent=11 // pred_check
          %p122 = pneg %p60
        $region14: #{_linear_apply.1} parent=11 // pred_check_branch
          %124 = sbr.rel (%p122) target = $region16
        $region15: #{_linear_apply.1} parent=11 // pred_region
          %126 = vsyncadd [#allocation5], 0
          %s127 = sshll.u32 %s1, 4
          %s128 = int_to_ptr.hbm [resolvable:$true] %s127
          %s129 = sshll.u32 [#allocation4], 4
          %s130 = int_to_ptr.vmem [resolvable:$true] %s129
          %135 = dma.hbm_to_vmem [thread:$0]  %s128, 512, %s130, [#allocation5], 128, 128, 8
        $region16: #{_linear_apply.1} parent=11 // pred_fallthru
          _
        // Predicated region
        $region17: #{_linear_apply.1} parent=11 // pred_check
          %p136 = pneg %p81
        $region18: #{_linear_apply.1} parent=11 // pred_check_branch
          %138 = sbr.rel (%p136) target = $region20
        $region19: #{_linear_apply.1} parent=11 // pred_region
          _
        $region20: #{_linear_apply.1} parent=11 // pred_fallthru
          _
      $region12: #{_linear_apply.1} parent=5 // pred_fallthru
        _
      %p139 = scmp.lt.s32.totalorder %s13, 2
      // Predicated region
      $region21: #{_linear_apply.1} parent=5 // pred_check
        %p140 = pneg %p139
      $region22: #{_linear_apply.1} parent=5 // pred_check_branch
        %142 = sbr.rel (%p140) target = $region24
      $region23: #{_linear_apply.1} parent=5 // pred_region
        // Predicated region
        $region25: #{_linear_apply.1} parent=23 // pred_check
          %p143 = pneg %p33
        $region26: #{_linear_apply.1} parent=23 // pred_check_branch
          %145 = sbr.rel (%p143) target = $region28
        $region27: #{_linear_apply.1} parent=23 // pred_region
          %s146 = sand.u32 %s23, 1
          %s147 = scalar_lea.sflag [#allocation3], %s146
          %s148 = sand.u32 %s23, 1
          %s149 = smul.addr %s148, 8
          %s150 = scalar_lea.vmem [#allocation2], %s149
          %152 = vsyncadd %s147, 0
          %s153 = smul.addr %s13, 8
          %s154 = scalar_lea.hbm %s0, %s153
          %s156 = sshll.u32 %s154, 4
          %s157 = int_to_ptr.hbm [resolvable:$true] %s156
          %s158 = sshll.u32 %s150, 4
          %s159 = int_to_ptr.vmem [resolvable:$true] %s158
          %161 = dma.hbm_to_vmem [thread:$0]  %s157, 128, %s159, %s147
        $region28: #{_linear_apply.1} parent=23 // pred_fallthru
          _
      $region24: #{_linear_apply.1} parent=5 // pred_fallthru
        _
      %p162 = scmp.le.s32.totalorder 1, %s13
      %p163 = scmp.lt.s32.totalorder %s13, 3
      %p164 = pnand %p162, %p163
      %p165 = pneg %p164
      // Predicated region
      $region29: #{_linear_apply.1} parent=5 // pred_check
        _
      $region30: #{_linear_apply.1} parent=5 // pred_check_branch
        %167 = sbr.rel (%p164) target = $region32
      $region31: #{_linear_apply.1} parent=5 // pred_region
        %s168 = ssub.s32 %s13, 1
        %s169 = sand.u32 %s26, 1
        %s170 = scalar_lea.sflag [#allocation3], %s169
        %s171 = sand.u32 %s26, 1
        %s172 = smul.addr %s171, 8
        %s173 = scalar_lea.vmem [#allocation2], %s172
        // Predicated region
        $region33: #{_linear_apply.1} parent=31 // pred_check
          %p174 = pneg %p39
        $region34: #{_linear_apply.1} parent=31 // pred_check_branch
          %176 = sbr.rel (%p174) target = $region36
        $region35: #{_linear_apply.1} parent=31 // pred_region
          %178 = dma.done %s170, 128
        $region36: #{_linear_apply.1} parent=31 // pred_fallthru
          _
        // Predicated region
        $region37: #{_linear_apply.1} parent=31 // pred_check
          %p179 = pneg %p60
        $region38: #{_linear_apply.1} parent=31 // pred_check_branch
          %181 = sbr.rel (%p179) target = $region40
        $region39: #{_linear_apply.1} parent=31 // pred_region
          %183 = dma.done [#allocation5], 512
        $region40: #{_linear_apply.1} parent=31 // pred_fallthru
          _
        %s184 = sand.u32 %s26, 1
        %s185 = scalar_lea.sflag [#allocation3], %s184
        %s186 = sand.u32 %s26, 1
        %s187 = smul.addr %s186, 8
        %s188 = scalar_lea.vmem [#allocation2], %s187
        %p189 = pneg %p39
        %p190 = pneg %p36
        %p191 = pneg %p60
        %p192 = pneg %p57
        %p193 = pneg %p81
        %p194 = pneg %p78
        %p195 = pneg %p107
        %p196 = pneg %p104
        %p197 = scmp.lt.s32.totalorder %s18, 1
        %s198 = scalar_select %p197, %s18, 1
        %s199 = smul.addr %s198, 8
        %s200 = scalar_lea.vmem %s3, %s199
        %p201 = scmp.lt.s32.totalorder %s18, 1
        %s202 = scalar_select %p201, %s18, 1
        %s203 = smul.addr %s202, 8
        %s204 = scalar_lea.vmem %s3, %s203
        %v205 = vld [vmem:[%s173] sm:$0xff]
        %v206 = vld [vmem:[#allocation4] sm:$0xff]
        %v207 = vld [vmem:[#allocation4 + $0x8] sm:$0xff]
        %v208 = vld [vmem:[#allocation4 + $0x10] sm:$0xff]
        %v209 = vld [vmem:[#allocation4 + $0x18] sm:$0xff]
        %v210 = vld [vmem:[%s2] sm:$0x1]
        %v212 = vperm.slane %v210, 0
        %vm214 = vcmask 261120
        %v216 = vsel %vm214, %v205, 0
        %218 = vmatpush.msra.mxu0 0.0
        %219 = vmatpush.msra.mxu0 0.0
        %220 = vmatpush.msra.mxu0 0.0
        %221 = vmatpush.msra.mxu0 0.0
        %222 = vmatpush.msra.mxu0 0.0
        %223 = vmatpush.msra.mxu0 0.0
        %224 = vmatpush.msra.mxu0 0.0
        %225 = vmatpush.msra.mxu0 0.0
        %226 = vmatpush.msra.mxu0 0.0
        %227 = vmatpush.msra.mxu0 0.0
        %228 = vmatpush.msra.mxu0 0.0
        %229 = vmatpush.msra.mxu0 0.0
        %230 = vmatpush.msra.mxu0 %v209
        %231 = vmatpush.msra.mxu0 %v208
        %232 = vmatpush.msra.mxu0 %v207
        %233 = vmatpush.msra.mxu0 %v206
        %234 = vmatmul.f32.gmra.mxu0 %v216
        %v235 = vpop.f32.mrf.mxu0
        %v236 = vadd.f32 %v212, %v235
        %237 = vdwg.mxu0
        %238 = vst [vmem:[%s204] sm:$0xff] %v236
        %p239 = scmp.lt.s32.totalorder %s18, 1
        %s240 = scalar_select %p239, %s18, 1
        %s241 = smul.addr %s240, 8
        %s242 = scalar_lea.vmem %s3, %s241
        // Predicated region
        $region41: #{_linear_apply.1} parent=31 // pred_check
          %p243 = pneg %p104
        $region42: #{_linear_apply.1} parent=31 // pred_check_branch
          %245 = sbr.rel (%p243) target = $region44
        $region43: #{_linear_apply.1} parent=31 // pred_region
          _
        $region44: #{_linear_apply.1} parent=31 // pred_fallthru
          _
      $region32: #{_linear_apply.1} parent=5 // pred_fallthru
        _
      %p246 = scmp.le.s32.totalorder 2, %s13
      // Predicated region
      $region45: #{_linear_apply.1} parent=5 // pred_check
        %p247 = pneg %p246
      $region46: #{_linear_apply.1} parent=5 // pred_check_branch
        %249 = sbr.rel (%p247) target = $region48
      $region47: #{_linear_apply.1} parent=5 // pred_region
        %s250 = ssub.s32 %s13, 2
        // Predicated region
        $region49: #{_linear_apply.1} parent=47 // pred_check
          %p251 = pneg %p110
        $region50: #{_linear_apply.1} parent=47 // pred_check_branch
          %253 = sbr.rel (%p251) target = $region52
        $region51: #{_linear_apply.1} parent=47 // pred_region
          %p254 = scmp.lt.s32.totalorder %s19, 1
          %s255 = scalar_select %p254, %s19, 1
          %s256 = smul.addr %s255, 8
          %s257 = scalar_lea.vmem %s3, %s256
        $region52: #{_linear_apply.1} parent=47 // pred_fallthru
          _
      $region48: #{_linear_apply.1} parent=5 // pred_fallthru
        _
    $region6: #{_linear_apply.1} parent=1 // loop_footer
      %s17 = sadd.s32 1, %s13
    $region7: #{_linear_apply.1} parent=1 // loop_footer_branch
      %12 = sbr.rel target = $region3
    $region8: #{_linear_apply.1} parent=1 // loop_exit
      _
    %258 = vsyncpa [#allocation3], 1
    %s259 = scalar_lea.sflag [#allocation3], 1
    %260 = vsyncpa %s259, 1
    %261 = vsyncpa [#allocation5], 1

</llo_original>
